<compile_context>
chip_gen: v5e
topology: v5e:2x2
jax: 0.10.0
libtpu: 0.0.40
codegen_flags: <defaults>
</compile_context>

<pallas_src>
import functools

import jax
import jax.numpy as jnp
from jax.experimental import pallas as pl
from jax.experimental.pallas import tpu as pltpu


def _ce_label_smooth_kernel(
    inputs_ref,
    targets_ref,
    out_ref,
    acc_ref,
    *,
    epsilon,
    num_classes,
    batch,
    tile_b,
    tiles_per_split,
):
    # inputs_ref : (TILE_B, K) logits block in VMEM (native dtype)
    # targets_ref: (TILE_B, 1) int32 class indices in VMEM
    # out_ref    : (8, 128) f32 lane-dense output block (one per parallel split)
    # acc_ref    : (TILE_B, 1) f32 VMEM accumulator, persists across steps
    c = pl.program_id(0)       # parallel split (TensorCore) axis
    i = pl.program_id(1)       # arbitrary (reduction) axis over batch tiles

    @pl.when(i == 0)
    def _init():
        acc_ref[...] = jnp.zeros_like(acc_ref)

    x = inputs_ref[...]                                    # (TB, K) native dtype
    tb, k = x.shape
    t = targets_ref[...]                                   # (TB, 1) int32

    # (1, K) lane iota; broadcast over sublanes happens inside the compare.
    cls_ids = jax.lax.broadcasted_iota(jnp.int32, (1, k), 1)
    one_hot_mask = cls_ids == t                            # (TB, K) bool

    # Exact in the input dtype: max, and a single-element masked select per row.
    m = jnp.max(x, axis=1, keepdims=True).astype(jnp.float32)              # (TB,1)
    tgt_x = jnp.sum(
        jnp.where(one_hot_mask, x, jnp.zeros((), dtype=x.dtype)),
        axis=1,
        keepdims=True,
    ).astype(jnp.float32)                                                   # (TB,1)

    # f32 for the exp / accumulation paths (numerical accuracy).
    xf = x.astype(jnp.float32)                                              # (TB,K)
    lse = jnp.log(jnp.sum(jnp.exp(xf - m), axis=1, keepdims=True))          # (TB,1)
    sum_x = jnp.sum(xf, axis=1, keepdims=True)                              # (TB,1)

    # Label-smoothed CE, algebraically reduced (K*lse term cancels):
    #   loss_row = logsumexp(x) - (1-eps)*x[target] - (eps/K)*sum_k x[k]
    row_loss = (m + lse) - (1.0 - epsilon) * tgt_x - (epsilon / num_classes) * sum_x

    # Row-valid mask: handles both the ragged last tile (block DMA reads past
    # the true batch -> garbage rows) and duplicated clamped tiles of the
    # parallel split.  NOTE: Pallas does no bounds check on these reads; the
    # select discards the garbage (select does not propagate NaN/Inf).
    gt = c * tiles_per_split + i                           # logical (unclamped) tile
    row_ids = gt * tile_b + jax.lax.broadcasted_iota(jnp.int32, (tb, 1), 0)
    row_loss = jnp.where(row_ids < batch, row_loss, jnp.float32(0.0))

    # Vector accumulate (VPU add) -- no cross-sublane reduce / scalar RMW per step.
    acc_ref[...] += row_loss

    @pl.when(i == pl.num_programs(1) - 1)
    def _finalize():
        partial = jnp.sum(acc_ref[...])
        # Lane-dense unmasked store of the per-core partial sum.
        out_ref[...] = jnp.full(out_ref.shape, partial, jnp.float32)


def _vmem_capacity_bytes():
    try:
        info = pltpu.get_tpu_info()
        cap = getattr(info, "vmem_capacity_bytes", None)
        if cap:
            return int(cap)
    except Exception:
        pass
    return 64 * 1024 * 1024  # conservative fallback (v7x physical VMEM)


def _choose_tiling(batch, num_classes):
    phys = _vmem_capacity_bytes()
    # Request most of physical VMEM, leaving headroom for Mosaic internals:
    #   v5e/v6e (128 MiB phys) -> 100 MiB; v7x (64 MiB phys) -> ~51 MiB.
    vmem_limit = min(int(phys * 0.8), 100 * 1024 * 1024)
    # Residency ~= 2 double-buffered input blocks + ~2 f32 temporaries of the
    # same (TILE_B, K) shape -> cap one f32 tile at ~1/5 of the scoped limit.
    max_tile_elems = vmem_limit // (5 * 4)
    max_rows = max(8, (max_tile_elems // max(num_classes, 1)) // 8 * 8)
    # TODO(synk): K-tiling + online logsumexp needed if 8*K f32 alone overflows VMEM.
    if batch <= max_rows:
        # Split into (at least) two tiles when possible so both v7x cores get work.
        half = (((batch + 1) // 2) + 7) // 8 * 8
        tile_b = half if (batch >= 16 and half < batch) else batch
    else:
        tile_b = max_rows
    return int(tile_b), int(vmem_limit)


def cross_entropy_label_smooth(inputs, targets, *, epsilon=0.1, tile_b=None):
    """inputs: (B, num_classes) float logits; targets: (B,) int class labels."""
    batch, num_classes = inputs.shape
    # NOTE: targets block is 1-lane wide (minor cost; a lane-dense layout or
    # scalar prefetch would remove a narrow per-step DMA but adds plumbing).
    targets_2d = targets.astype(jnp.int32).reshape(batch, 1)

    auto_tile_b, vmem_limit = _choose_tiling(batch, num_classes)
    if tile_b is None:
        tile_b = auto_tile_b
    else:
        assert tile_b == batch or tile_b % 8 == 0, "tile_b must be batch or a multiple of 8"
    tile_b = int(tile_b)

    num_tiles = pl.cdiv(batch, tile_b)
    num_splits = 2 if num_tiles >= 2 else 1        # dual-TC split on v7x
    tiles_per_split = pl.cdiv(num_tiles, num_splits)

    def _block_idx(c, i):
        # Clamp so the DMA never targets a block fully past the array; the
        # duplicated tile is zeroed by the in-kernel row mask.
        gt = c * tiles_per_split + i
        return jnp.minimum(gt, num_tiles - 1)

    grid = (num_splits, tiles_per_split)

    out = pl.pallas_call(
        functools.partial(
            _ce_label_smooth_kernel,
            epsilon=float(epsilon),
            num_classes=int(num_classes),
            batch=int(batch),
            tile_b=tile_b,
            tiles_per_split=int(tiles_per_split),
        ),
        out_shape=jax.ShapeDtypeStruct((num_splits * 8, 128), jnp.float32),
        grid=grid,
        in_specs=[
            pl.BlockSpec((tile_b, num_classes), lambda c, i: (_block_idx(c, i), 0)),
            pl.BlockSpec((tile_b, 1), lambda c, i: (_block_idx(c, i), 0)),
        ],
        # Lane-dense (8,128) f32 output block per parallel split; block is
        # resident across the whole "arbitrary" axis (written only in finalize).
        out_specs=pl.BlockSpec((8, 128), lambda c, i: (c, 0)),
        scratch_shapes=[pltpu.VMEM((tile_b, 1), jnp.float32)],
        compiler_params=pltpu.CompilerParams(
            dimension_semantics=("parallel", "arbitrary"),
            vmem_limit_bytes=vmem_limit,
        ),
    )(inputs, targets_2d)

    # Sum the per-core partial sums and normalize by the true batch size.
    return jnp.sum(out[::8, 0]) / jnp.float32(batch)


def _reference(inputs, targets, epsilon=0.1):
    num_classes = inputs.shape[1]
    log_probs = jax.nn.log_softmax(inputs.astype(jnp.float32), axis=1)
    onehot = jax.nn.one_hot(targets, num_classes, dtype=jnp.float32)
    smooth = (1.0 - epsilon) * onehot + epsilon / num_classes
    return jnp.sum(jnp.mean(-smooth * log_probs, axis=0))


if __name__ == "__main__":
    key = jax.random.PRNGKey(0)

    # Test 1: small shape, single tile, single split.
    k1, k2 = jax.random.split(key)
    b, nc = 8, 16
    logits = jax.random.normal(k1, (b, nc), dtype=jnp.float32)
    labels = jax.random.randint(k2, (b,), 0, nc, dtype=jnp.int32)
    loss = jax.block_until_ready(cross_entropy_label_smooth(logits, labels, epsilon=0.1))
    ref = _reference(logits, labels, epsilon=0.1)
    assert jnp.allclose(loss, ref, atol=1e-5, rtol=1e-5), (loss, ref)

    # Test 2: multi-tile grid, 2-way parallel split, ragged + clamped duplicate tile.
    k1, k2 = jax.random.split(jax.random.PRNGKey(1))
    b, nc = 20, 128
    logits = jax.random.normal(k1, (b, nc), dtype=jnp.float32)
    labels = jax.random.randint(k2, (b,), 0, nc, dtype=jnp.int32)
    loss = jax.block_until_ready(
        cross_entropy_label_smooth(logits, labels, epsilon=0.1, tile_b=8)
    )
    ref = _reference(logits, labels, epsilon=0.1)
    assert jnp.allclose(loss, ref, atol=1e-5, rtol=1e-5), (loss, ref)

    # Test 3: bf16 logits (max / target-select stay bf16; exp path in f32).
    k1, k2 = jax.random.split(jax.random.PRNGKey(2))
    b, nc = 16, 256
    logits = jax.random.normal(k1, (b, nc), dtype=jnp.float32).astype(jnp.bfloat16)
    labels = jax.random.randint(k2, (b,), 0, nc, dtype=jnp.int32)
    loss = jax.block_until_ready(cross_entropy_label_smooth(logits, labels, epsilon=0.1))
    ref = _reference(logits, labels, epsilon=0.1)
    assert jnp.allclose(loss, ref, atol=1e-3, rtol=1e-3), (loss, ref)

    # Test 4: auto tiling with a non-divisible batch (exercises auto split + mask).
    k1, k2 = jax.random.split(jax.random.PRNGKey(3))
    b, nc = 40, 384
    logits = jax.random.normal(k1, (b, nc), dtype=jnp.float32)
    labels = jax.random.randint(k2, (b,), 0, nc, dtype=jnp.int32)
    loss = jax.block_until_ready(cross_entropy_label_smooth(logits, labels, epsilon=0.1))
    ref = _reference(logits, labels, epsilon=0.1)
    assert jnp.allclose(loss, ref, atol=1e-5, rtol=1e-5), (loss, ref)

    print("KERNEL_OK")
</pallas_src>

<mosaic_0001>
module attributes {stable_mosaic.version = 11 : i64} {
  func.func @_ce_label_smooth_kernel(%arg0: i32, %arg1: i32, %arg2: memref<8x16xf32, #tpu.memory_space<vmem>>, %arg3: memref<8x1xi32, #tpu.memory_space<vmem>>, %arg4: memref<8x128xf32, #tpu.memory_space<vmem>>, %arg5: memref<8x1xf32, #tpu.memory_space<vmem>>) attributes {dimension_semantics = [#tpu.dimension_semantics<parallel>, #tpu.dimension_semantics<arbitrary>], iteration_bounds = array<i64: 1, 1>, scalar_prefetch = 0 : i64, scratch_operands = 1 : i64, tpu.core_type = #tpu.core_type<tc>, window_params = [{transform_indices = @transform_0, window_bounds = array<i64: 8, 16>}, {transform_indices = @transform_1, window_bounds = array<i64: 8, 1>}, {transform_indices = @transform_2, window_bounds = array<i64: 8, 128>}]} {
    %c0_i32 = arith.constant 0 : i32
    %0 = arith.cmpi eq, %arg1, %c0_i32 : i32
    %1 = arith.extui %0 : i1 to i32
    %c0_i32_0 = arith.constant 0 : i32
    %2 = arith.cmpi ne, %1, %c0_i32_0 : i32
    scf.if %2 {
      %cst_18 = arith.constant 0.000000e+00 : f32
      %46 = vector.broadcast %cst_18 : f32 to vector<8x1xf32>
      %c0_19 = arith.constant 0 : index
      %c0_20 = arith.constant 0 : index
      %47 = vector.load %arg5[%c0_19, %c0_20] : memref<8x1xf32, #tpu.memory_space<vmem>>, vector<8x1xf32>
      tpu.vector_store %arg5[%c0_19, %c0_20], %46 {strides = array<i32>} : memref<8x1xf32, #tpu.memory_space<vmem>>, vector<8x1xf32>,
    } else {
    }
    %c0 = arith.constant 0 : index
    %c0_1 = arith.constant 0 : index
    %3 = vector.load %arg2[%c0, %c0_1] : memref<8x16xf32, #tpu.memory_space<vmem>>, vector<8x16xf32>
    %c0_2 = arith.constant 0 : index
    %c0_3 = arith.constant 0 : index
    %4 = vector.load %arg3[%c0_2, %c0_3] : memref<8x1xi32, #tpu.memory_space<vmem>>, vector<8x1xi32>
    %5 = tpu.iota {dimensions = array<i32: 1>} : vector<1x16xi32>
    %6 = vector.broadcast %5 : vector<1x16xi32> to vector<8x16xi32>
    %7 = vector.broadcast %4 : vector<8x1xi32> to vector<8x16xi32>
    %8 = arith.cmpi eq, %6, %7 : vector<8x16xi32>
    %cst = arith.constant dense<0xFF800000> : vector<8xf32>
    %9 = vector.multi_reduction <maximumf>, %3, %cst [1] : vector<8x16xf32> to vector<8xf32>
    %10 = vector.shape_cast %9 : vector<8xf32> to vector<8x1xf32>
    %cst_4 = arith.constant 0.000000e+00 : f32
    %11 = vector.broadcast %cst_4 : f32 to vector<8x16xf32>
    %12 = arith.select %8, %3, %11 : vector<8x16xi1>, vector<8x16xf32>
    %cst_5 = arith.constant dense<0.000000e+00> : vector<8xf32>
    %13 = vector.multi_reduction <add>, %12, %cst_5 [1] : vector<8x16xf32> to vector<8xf32>
    %14 = vector.shape_cast %13 : vector<8xf32> to vector<8x1xf32>
    %15 = vector.broadcast %10 : vector<8x1xf32> to vector<8x16xf32>
    %16 = arith.subf %3, %15 : vector<8x16xf32>
    %17 = math.exp %16 : vector<8x16xf32>
    %cst_6 = arith.constant dense<0.000000e+00> : vector<8xf32>
    %18 = vector.multi_reduction <add>, %17, %cst_6 [1] : vector<8x16xf32> to vector<8xf32>
    %19 = vector.shape_cast %18 : vector<8xf32> to vector<8x1xf32>
    %20 = math.log %19 : vector<8x1xf32>
    %cst_7 = arith.constant dense<0.000000e+00> : vector<8xf32>
    %21 = vector.multi_reduction <add>, %3, %cst_7 [1] : vector<8x16xf32> to vector<8xf32>
    %22 = vector.shape_cast %21 : vector<8xf32> to vector<8x1xf32>
    %23 = arith.addf %10, %20 : vector<8x1xf32>
    %cst_8 = arith.constant 0.899999976 : f32
    %24 = vector.broadcast %cst_8 : f32 to vector<8x1xf32>
    %25 = arith.mulf %24, %14 : vector<8x1xf32>
    %26 = arith.subf %23, %25 : vector<8x1xf32>
    %cst_9 = arith.constant 6.250000e-03 : f32
    %27 = vector.broadcast %cst_9 : f32 to vector<8x1xf32>
    %28 = arith.mulf %27, %22 : vector<8x1xf32>
    %29 = arith.subf %26, %28 : vector<8x1xf32>
    %c1_i32 = arith.constant 1 : i32
    %30 = arith.muli %arg0, %c1_i32 : i32
    %31 = arith.addi %30, %arg1 : i32
    %c8_i32 = arith.constant 8 : i32
    %32 = arith.muli %31, %c8_i32 : i32
    %33 = tpu.iota {dimensions = array<i32: 0>} : vector<8x1xi32>
    %34 = vector.broadcast %32 : i32 to vector<8x1xi32>
    %35 = arith.addi %34, %33 : vector<8x1xi32>
    %c8_i32_10 = arith.constant 8 : i32
    %36 = vector.broadcast %c8_i32_10 : i32 to vector<8x1xi32>
    %37 = arith.cmpi slt, %35, %36 : vector<8x1xi32>
    %cst_11 = arith.constant 0.000000e+00 : f32
    %38 = vector.broadcast %cst_11 : f32 to vector<8x1xf32>
    %39 = arith.select %37, %29, %38 : vector<8x1xi1>, vector<8x1xf32>
    %c0_12 = arith.constant 0 : index
    %c0_13 = arith.constant 0 : index
    %40 = vector.load %arg5[%c0_12, %c0_13] : memref<8x1xf32, #tpu.memory_space<vmem>>, vector<8x1xf32>
    %41 = arith.addf %40, %39 : vector<8x1xf32>
    %c0_14 = arith.constant 0 : index
    %c0_15 = arith.constant 0 : index
    %42 = vector.load %arg5[%c0_14, %c0_15] : memref<8x1xf32, #tpu.memory_space<vmem>>, vector<8x1xf32>
    tpu.vector_store %arg5[%c0_14, %c0_15], %41 {strides = array<i32>} : memref<8x1xf32, #tpu.memory_space<vmem>>, vector<8x1xf32>,
    %c0_i32_16 = arith.constant 0 : i32
    %43 = arith.cmpi eq, %arg1, %c0_i32_16 : i32
    %44 = arith.extui %43 : i1 to i32
    %c0_i32_17 = arith.constant 0 : i32
    %45 = arith.cmpi ne, %44, %c0_i32_17 : i32
    scf.if %45 {
      %c0_18 = arith.constant 0 : index
      %c0_19 = arith.constant 0 : index
      %46 = vector.load %arg5[%c0_18, %c0_19] : memref<8x1xf32, #tpu.memory_space<vmem>>, vector<8x1xf32>
      %47 = vector.shape_cast %46 : vector<8x1xf32> to vector<1x8x1xf32>
      %cst_20 = arith.constant dense<0.000000e+00> : vector<1xf32>
      %48 = vector.multi_reduction <add>, %47, %cst_20 [1, 2] : vector<1x8x1xf32> to vector<1xf32>
      %49 = vector.shape_cast %48 : vector<1xf32> to vector<1x1x1xf32>
      %50 = vector.extract %49[0, 0, 0] : f32 from vector<1x1x1xf32>
      %51 = vector.broadcast %50 : f32 to vector<8x128xf32>
      %c0_21 = arith.constant 0 : index
      %c0_22 = arith.constant 0 : index
      %52 = vector.load %arg4[%c0_21, %c0_22] : memref<8x128xf32, #tpu.memory_space<vmem>>, vector<8x128xf32>
      tpu.vector_store %arg4[%c0_21, %c0_22], %51 {strides = array<i32>} : memref<8x128xf32, #tpu.memory_space<vmem>>, vector<8x128xf32>,
    } else {
    }
    return
  }
  func.func @transform_0(%arg0: i32, %arg1: i32) -> (i32, i32) {
    %c1_i32 = arith.constant 1 : i32
    %0 = arith.muli %arg0, %c1_i32 : i32
    %1 = arith.addi %0, %arg1 : i32
    %c0_i32 = arith.constant 0 : i32
    %2 = arith.minsi %1, %c0_i32 : i32
    %c0_i32_0 = arith.constant 0 : i32
    %c0_i32_1 = arith.constant 0 : i32
    return %2, %c0_i32_0 : i32, i32
  }
  func.func @transform_1(%arg0: i32, %arg1: i32) -> (i32, i32) {
    %c1_i32 = arith.constant 1 : i32
    %0 = arith.muli %arg0, %c1_i32 : i32
    %1 = arith.addi %0, %arg1 : i32
    %c0_i32 = arith.constant 0 : i32
    %2 = arith.minsi %1, %c0_i32 : i32
    %c0_i32_0 = arith.constant 0 : i32
    %c0_i32_1 = arith.constant 0 : i32
    return %2, %c0_i32_0 : i32, i32
  }
  func.func @transform_2(%arg0: i32, %arg1: i32) -> (i32, i32) {
    %c0_i32 = arith.constant 0 : i32
    %c0_i32_0 = arith.constant 0 : i32
    return %arg0, %c0_i32 : i32, i32
  }
}

</mosaic_0001>

<llo_original>
// kernel: tpu_custom_call.1
$region0: #{tpu_custom_call.1}
  #allocation0 [shape = 'u32[]', space=smem, size = 0x4, offset = 0x4, fixed_abs, tag = 'smem constant byte address 0x4 - core index']
  #allocation1 [shape = 'u32[72,128]{1,0:T(1,128)}', space=vmem, size = 0x9000, scoped, tag = 'internal scratch']
  #allocation2 [shape = 'f32[8,1]{1,0:T(8,128)}', space=vmem, size = 0x1000, scoped, tag = 'scratch operand']
  %s0 = inlined_call_operand.vmem [shape: f32[8,16], index: 0, kind: input, shape index: {}]
  %s1 = inlined_call_operand.vmem [shape: s32[8,1], index: 1, kind: input, shape index: {}]
  %s2 = inlined_call_operand.hbm [shape: f32[8,128], index: 2, kind: output, shape index: {}]
  %s3 = sld [smem:[#allocation0]]
  $region26: #{tpu_custom_call.1} parent=0
    _
  %s5 = ssub.s32 1, %s3
  %s6 = scalar_select 0, %s5, %s3
  $region1: #{tpu_custom_call.1} parent=0
    #allocation3 [shape = 'u8[4096]{0}', space=vmem, size = 0x1000, scoped, tag = 'output window, operand 0, single buffered']
    #allocation4 [shape = 's32[1]{0}', space=sflag, size = 0x4, scoped, tag = 'scoped memory for tpu_custom_call.1']
    %7 = vsyncpa [#allocation4], 0
    // Predicated region
    $region2: #{tpu_custom_call.1} parent=1 // pred_check
      _
    $region3: #{tpu_custom_call.1} parent=1 // pred_check_branch
      %9 = sbr.rel (0) target = $region5
    $region4: #{tpu_custom_call.1} parent=1 // pred_region
      %s10 = sadd.s32 0, 0
      %p11 = scmp.lt.s32.totalorder %s10, 0
      %s12 = scalar_select %p11, %s10, 0
      %p13 = scmp.lt.s32.totalorder %s12, 0
      %s14 = scalar_select %p13, %s12, 0
      %s15 = smul.addr %s14, 8
      %s16 = scalar_lea.vmem %s0, %s15
      %s17 = sadd.s32 0, 0
      %p18 = scmp.lt.s32.totalorder %s17, 0
      %s19 = scalar_select %p18, %s17, 0
    $region5: #{tpu_custom_call.1} parent=1 // pred_fallthru
      _
    // Predicated region
    $region6: #{tpu_custom_call.1} parent=1 // pred_check
      _
    $region7: #{tpu_custom_call.1} parent=1 // pred_check_branch
      %21 = sbr.rel (0) target = $region9
    $region8: #{tpu_custom_call.1} parent=1 // pred_region
      %s22 = sadd.s32 0, 0
      %p23 = scmp.lt.s32.totalorder %s22, 0
      %s24 = scalar_select %p23, %s22, 0
      %p25 = scmp.lt.s32.totalorder %s24, 0
      %s26 = scalar_select %p25, %s24, 0
      %s27 = smul.addr %s26, 8
      %s28 = scalar_lea.vmem %s1, %s27
      %s29 = sadd.s32 0, 0
      %p30 = scmp.lt.s32.totalorder %s29, 0
      %s31 = scalar_select %p30, %s29, 0
    $region9: #{tpu_custom_call.1} parent=1 // pred_fallthru
      _
    %s32 = sadd.s32 0, 0
    %p33 = scmp.lt.s32.totalorder %s32, 0
    %s34 = scalar_select %p33, %s32, 0
    %p35 = scmp.lt.s32.totalorder %s34, 0
    %s36 = scalar_select %p35, %s34, 0
    %s37 = smul.addr %s36, 8
    %s38 = scalar_lea.vmem %s0, %s37
    %s39 = sadd.s32 0, 0
    %p40 = scmp.lt.s32.totalorder %s39, 0
    %s41 = scalar_select %p40, %s39, 0
    %p42 = scmp.lt.s32.totalorder %s41, 0
    %s43 = scalar_select %p42, %s41, 0
    %s44 = smul.addr %s43, 8
    %s45 = scalar_lea.vmem %s1, %s44
    %s46 = sadd.s32 0, 0
    %p47 = scmp.lt.s32.totalorder %s46, 0
    %s48 = scalar_select %p47, %s46, 0
    %p49 = scmp.lt.s32.totalorder %s48, 0
    %s50 = scalar_select %p49, %s48, 0
    %s51 = smul.addr %s50, 8
    %s52 = scalar_lea.vmem %s0, %s51
    %s53 = sadd.s32 0, 0
    %p54 = scmp.lt.s32.totalorder %s53, 0
    %s55 = scalar_select %p54, %s53, 0
    %s56 = sadd.s32 0, 0
    %p57 = scmp.lt.s32.totalorder %s56, 0
    %s58 = scalar_select %p57, %s56, 0
    %p59 = scmp.lt.s32.totalorder %s58, 0
    %s60 = scalar_select %p59, %s58, 0
    %s61 = smul.addr %s60, 8
    %s62 = scalar_lea.vmem %s1, %s61
    %s63 = sadd.s32 0, 0
    %p64 = scmp.lt.s32.totalorder %s63, 0
    %s65 = scalar_select %p64, %s63, 0
    %p66 = scmp.eq.s32.totalorder 0, 0
    // Predicated region
    $region10: #{tpu_custom_call.1} parent=1 // pred_check
      %p67 = pneg %p66
    $region11: #{tpu_custom_call.1} parent=1 // pred_check_branch
      %69 = sbr.rel (%p67) target = $region13
    $region12: #{tpu_custom_call.1} parent=1 // pred_region
      %vm70 = vcmask 7168
      %71 = vst.msk [vmem:[#allocation2] sm:$0xff] %vm70, 0.0
    $region13: #{tpu_custom_call.1} parent=1 // pred_fallthru
      _
    %v72 = vld [vmem:[%s52] sm:$0xff]
    %v73 = vld [vmem:[%s62] sm:$0xff]
    %v74 = vlaneseq
    %v75 = vand.u32 %v74, 127
    %76 = vset.pattern.permute.xlu0 0
    %77 = vperm.xlu0 %76, %v73
    %v78 = vpop.permute.xlu0 %77
    %vm79 = vcmp.eq.s32.totalorder %v75, %v78
    %vm80 = vcmask 130048
    %v81 = vsel %vm80, %v72, -inf
    %82 = vmax.xlane.f32.xlu0 %v81
    %v83 = vpop.xlane.xlu0 %82
    %v84 = vsel %vm79, %v72, 0.0
    %v85 = vsel %vm80, %v84, 0.0
    %86 = vadd.xlane.f32.xlu0 %v85
    %v87 = vpop.xlane.xlu0 %86
    %v88 = vsub.f32 %v72, %v83
    %v89 = vmul.f32 %v88, 1.442695
    %v90 = vpow.pop %v89
    %v91 = vsel %vm80, %v90, 0.0
    %92 = vadd.xlane.f32.xlu0 %v91
    %v93 = vpop.xlane.xlu0 %92
    %v94 = vlog2.pop %v93
    %v95 = vmul.f32 %v94, 0.6931472
    %v96 = vsel %vm80, %v72, 0.0
    %97 = vadd.xlane.f32.xlu0 %v96
    %v98 = vpop.xlane.xlu0 %97
    %v99 = vadd.f32 %v83, %v95
    %v100 = vmul.f32 %v87, 0.9
    %v101 = vsub.f32 %v99, %v100
    %v102 = vmul.f32 %v98, 0.00625
    %v103 = vsub.f32 %v101, %v102
    %s104 = sadd.s32 0, 0
    %s105 = smul.u32 %s104, 8
    %v106 = vlaneseq
    %v107 = vshrl.u32 %v106, 7
    %v108 = vstv %s105
    %v109 = vadd.s32 %v108, %v107
    %vm110 = vcmp.lt.s32.totalorder %v109, 8
    %v111 = vsel %vm110, %v103, 0.0
    %v112 = vld [vmem:[#allocation2] sm:$0xff]
    %v113 = vadd.f32 %v112, %v111
    %vm114 = vcmask 7168
    %115 = vst.msk [vmem:[#allocation2] sm:$0xff] %vm114, %v113
    // Predicated region
    $region14: #{tpu_custom_call.1} parent=1 // pred_check
      %p116 = pneg %p66
    $region15: #{tpu_custom_call.1} parent=1 // pred_check_branch
      %118 = sbr.rel (%p116) target = $region17
    $region16: #{tpu_custom_call.1} parent=1 // pred_region
      %v119 = vld [vmem:[#allocation2] sm:$0xff]
      %v120 = vsel %vm114, %v119, 0.0
      %121 = vadd.xlane.f32.xlu0 %v120
      %v122 = vpop.xlane.xlu0 %121
      %v123 = vrot.slane %v122, 4
      %v124 = vadd.f32 %v122, %v123
      %v125 = vrot.slane %v124, 2
      %v126 = vadd.f32 %v124, %v125
      %v127 = vrot.slane %v126, 1
      %v128 = vadd.f32 %v126, %v127
      %s129 = vtos %v128
      %v130 = vstv %s129
      %131 = vst [vmem:[#allocation3] sm:$0xff] %v130
    $region17: #{tpu_custom_call.1} parent=1 // pred_fallthru
      _
    // Predicated region
    $region18: #{tpu_custom_call.1} parent=1 // pred_check
      _
    $region19: #{tpu_custom_call.1} parent=1 // pred_check_branch
      %133 = sbr.rel (0) target = $region21
    $region20: #{tpu_custom_call.1} parent=1 // pred_region
      %135 = vsyncadd [#allocation4], 0
      %s137 = sshll.u32 [#allocation3], 4
      %s138 = int_to_ptr.vmem [resolvable:$true] %s137
      %s139 = sshll.u32 %s2, 4
      %s140 = int_to_ptr.hbm [resolvable:$true] %s139
      %142 = dma.vmem_to_hbm [thread:$0]  %s138, 128, %s140, [#allocation4]
    $region21: #{tpu_custom_call.1} parent=1 // pred_fallthru
      _
    // Predicated region
    $region22: #{tpu_custom_call.1} parent=1 // pred_check
      _
    $region23: #{tpu_custom_call.1} parent=1 // pred_check_branch
      %144 = sbr.rel (0) target = $region25
    $region24: #{tpu_custom_call.1} parent=1 // pred_region
      %146 = dma.done [#allocation4], 128
    $region25: #{tpu_custom_call.1} parent=1 // pred_fallthru
      _
    %147 = vsyncpa [#allocation4], 1

</llo_original>
